<compile_context>
chip_gen: v6e
topology: v6e:2x2x1
jax: 0.10.0
libtpu: 0.0.40
codegen_flags: <defaults>
</compile_context>

<pallas_src>
import functools
import math

import jax
import jax.numpy as jnp
from jax import lax
from jax.experimental import pallas as pl
from jax.experimental.pallas import tpu as pltpu


# Contract last dim of lhs with last dim of rhs (i.e. lhs @ rhs.T) without
# materializing the transpose — the MXU consumes it natively.
_TRANS_B = (((1,), (1,)), ((), ()))


def _latent_atten_kernel(hm_ref, hr_ref, wk_ref, bk_ref, wq_ref, bq_ref, o_ref,
                         *, m_rows, key_dim, scale):
    # ---- fused projection: one MXU contraction for BOTH Linear layers -----
    #   lhs = [h_M ; h_R]        (M+R, h_dim)
    #   rhs = [w_key ; w_query]  (2*key_dim, h_dim)   (PyTorch (out,in) layout)
    lhs = jnp.concatenate([hm_ref[...], hr_ref[...]], axis=0).astype(jnp.bfloat16)
    rhs = jnp.concatenate([wk_ref[...], wq_ref[...]], axis=0).astype(jnp.bfloat16)
    proj = lax.dot_general(lhs, rhs, _TRANS_B,
                           preferred_element_type=jnp.float32)  # (M+R, 2*key_dim)

    # key = h_M @ w_key.T + b_key ; query = h_R @ w_query.T + b_query
    # 1/sqrt(key_dim) folded into the key tile (keeps it off the (M,R) scores).
    key = (proj[:m_rows, :key_dim] + bk_ref[...]) * scale        # (M, key_dim) f32
    query = proj[m_rows:, key_dim:] + bq_ref[...]                # (R, key_dim) f32

    # scores = (key / sqrt(key_dim)) @ query.T, f32 accumulation on the MXU
    s = lax.dot_general(key.astype(jnp.bfloat16), query.astype(jnp.bfloat16),
                        _TRANS_B, preferred_element_type=jnp.float32)  # (M, R)

    # softmax over dim=1 (the R axis), numerically stabilized, all f32
    s = s - jnp.max(s, axis=-1, keepdims=True)
    p = jnp.exp(s)
    inv = pl.reciprocal(jnp.sum(p, axis=-1, keepdims=True), approx=False)
    o_ref[...] = (p * inv).astype(o_ref.dtype)


def latent_atten_pallas(h_M, h_R, w_key, b_key, w_query, b_query):
    """h_M: (M, h) or (B, M, h); h_R: (R, h) or (B, R, h). Weights are shared."""
    squeeze = h_M.ndim == 2
    if squeeze:
        h_M = h_M[None]
        h_R = h_R[None]
    B, M, h_dim = h_M.shape
    _, R, _ = h_R.shape
    key_dim = w_key.shape[0]

    kernel = functools.partial(_latent_atten_kernel, m_rows=M, key_dim=key_dim,
                               scale=1.0 / math.sqrt(key_dim))

    out = pl.pallas_call(
        kernel,
        out_shape=jax.ShapeDtypeStruct((B, M, R), h_M.dtype),
        grid_spec=pltpu.PrefetchScalarGridSpec(
            num_scalar_prefetch=0,
            grid=(B,),
            in_specs=[
                pl.BlockSpec((None, M, h_dim), lambda b: (b, 0, 0)),
                pl.BlockSpec((None, R, h_dim), lambda b: (b, 0, 0)),
                pl.BlockSpec((key_dim, h_dim), lambda b: (0, 0)),
                pl.BlockSpec((1, key_dim), lambda b: (0, 0)),
                pl.BlockSpec((key_dim, h_dim), lambda b: (0, 0)),
                pl.BlockSpec((1, key_dim), lambda b: (0, 0)),
            ],
            out_specs=pl.BlockSpec((None, M, R), lambda b: (b, 0, 0)),
        ),
        compiler_params=pltpu.CompilerParams(
            dimension_semantics=("parallel",)),
    )(h_M, h_R, w_key, b_key, w_query, b_query)
    return out[0] if squeeze else out


def latent_atten_ref(h_M, h_R, w_key, b_key, w_query, b_query):
    """Pure-JAX reference with identical semantics to the PyTorch module."""
    key_dim = w_key.shape[0]
    key = h_M @ w_key.T + b_key
    query = h_R @ w_query.T + b_query
    atten = key @ query.T / math.sqrt(key_dim)
    return jax.nn.softmax(atten, axis=1)


if __name__ == "__main__":
    M, R, h_dim, key_dim = 8, 16, 32, 32     # h_M: (8, 32), h_R: (16, 32)
    B = 8                                    # batched-instance demo

    rng = jax.random.PRNGKey(0)
    k0, k1, k2, k3, k4, k5, k6, k7 = jax.random.split(rng, 8)
    bound = 1.0 / math.sqrt(h_dim)

    h_M = jax.random.normal(k0, (M, h_dim), dtype=jnp.float32)
    h_R = jax.random.normal(k1, (R, h_dim), dtype=jnp.float32)

    # PyTorch Linear convention: weight (out, in), bias broadcast as (1, out).
    w_key = jax.random.uniform(k2, (key_dim, h_dim), minval=-bound, maxval=bound,
                               dtype=jnp.float32)
    b_key = jax.random.uniform(k3, (1, key_dim), minval=-bound, maxval=bound,
                               dtype=jnp.float32)
    w_query = jax.random.uniform(k4, (key_dim, h_dim), minval=-bound, maxval=bound,
                                 dtype=jnp.float32)
    b_query = jax.random.uniform(k5, (1, key_dim), minval=-bound, maxval=bound,
                                 dtype=jnp.float32)

    # ---- single instance (matches the PyTorch module's forward exactly) ----
    out = latent_atten_pallas(h_M, h_R, w_key, b_key, w_query, b_query)
    out = jax.block_until_ready(out)
    ref = latent_atten_ref(h_M, h_R, w_key, b_key, w_query, b_query)
    assert out.shape == (M, R)
    assert jnp.allclose(out, ref, atol=2e-3, rtol=2e-3), "mismatch vs reference"
    assert jnp.allclose(jnp.sum(out, axis=1), jnp.ones((M,)), atol=1e-5), \
        "rows must sum to 1"

    # ---- batched instances: one pallas_call, grid over B (parallel) --------
    h_M_b = jax.random.normal(k6, (B, M, h_dim), dtype=jnp.float32)
    h_R_b = jax.random.normal(k7, (B, R, h_dim), dtype=jnp.float32)
    out_b = latent_atten_pallas(h_M_b, h_R_b, w_key, b_key, w_query, b_query)
    out_b = jax.block_until_ready(out_b)
    ref_b = jax.vmap(latent_atten_ref, in_axes=(0, 0, None, None, None, None))(
        h_M_b, h_R_b, w_key, b_key, w_query, b_query)
    assert out_b.shape == (B, M, R)
    assert jnp.allclose(out_b, ref_b, atol=2e-3, rtol=2e-3), "batched mismatch"
    assert jnp.allclose(jnp.sum(out_b, axis=-1), jnp.ones((B, M)), atol=1e-5), \
        "batched rows must sum to 1"

    print("KERNEL_OK")
</pallas_src>

<mosaic_0001>
module attributes {stable_mosaic.version = 11 : i64} {
  func.func @_latent_atten_kernel(%arg0: i32, %arg1: memref<1x8x32xf32, #tpu.memory_space<vmem>>, %arg2: memref<1x16x32xf32, #tpu.memory_space<vmem>>, %arg3: memref<32x32xf32, #tpu.memory_space<vmem>>, %arg4: memref<1x32xf32, #tpu.memory_space<vmem>>, %arg5: memref<32x32xf32, #tpu.memory_space<vmem>>, %arg6: memref<1x32xf32, #tpu.memory_space<vmem>>, %arg7: memref<1x8x16xf32, #tpu.memory_space<vmem>>) attributes {dimension_semantics = [#tpu.dimension_semantics<parallel>], iteration_bounds = array<i64: 1>, scalar_prefetch = 0 : i64, scratch_operands = 0 : i64, tpu.core_type = #tpu.core_type<tc>, window_params = [{transform_indices = @transform_0, window_bounds = array<i64: 1, 8, 32>}, {transform_indices = @transform_1, window_bounds = array<i64: 1, 16, 32>}, {pipeline_mode = #tpu.pipeline_mode<synchronous>, transform_indices = @transform_2, window_bounds = array<i64: 32, 32>}, {pipeline_mode = #tpu.pipeline_mode<synchronous>, transform_indices = @transform_3, window_bounds = array<i64: 1, 32>}, {pipeline_mode = #tpu.pipeline_mode<synchronous>, transform_indices = @transform_4, window_bounds = array<i64: 32, 32>}, {pipeline_mode = #tpu.pipeline_mode<synchronous>, transform_indices = @transform_5, window_bounds = array<i64: 1, 32>}, {transform_indices = @transform_6, window_bounds = array<i64: 1, 8, 16>}]} {
    %c0 = arith.constant 0 : index
    %c0_0 = arith.constant 0 : index
    %c0_1 = arith.constant 0 : index
    %0 = vector.load %arg1[%c0, %c0_0, %c0_1] : memref<1x8x32xf32, #tpu.memory_space<vmem>>, vector<1x8x32xf32>
    %1 = vector.shape_cast %0 : vector<1x8x32xf32> to vector<8x32xf32>
    %c0_2 = arith.constant 0 : index
    %c0_3 = arith.constant 0 : index
    %c0_4 = arith.constant 0 : index
    %2 = vector.load %arg2[%c0_2, %c0_3, %c0_4] : memref<1x16x32xf32, #tpu.memory_space<vmem>>, vector<1x16x32xf32>
    %3 = vector.shape_cast %2 : vector<1x16x32xf32> to vector<16x32xf32>
    %4 = tpu.concatenate %1, %3 in 0 : vector<8x32xf32>, vector<16x32xf32> -> vector<24x32xf32>
    %5 = arith.truncf %4 : vector<24x32xf32> to vector<24x32xbf16>
    %c0_5 = arith.constant 0 : index
    %c0_6 = arith.constant 0 : index
    %6 = vector.load %arg3[%c0_5, %c0_6] : memref<32x32xf32, #tpu.memory_space<vmem>>, vector<32x32xf32>
    %c0_7 = arith.constant 0 : index
    %c0_8 = arith.constant 0 : index
    %7 = vector.load %arg5[%c0_7, %c0_8] : memref<32x32xf32, #tpu.memory_space<vmem>>, vector<32x32xf32>
    %8 = tpu.concatenate %6, %7 in 0 : vector<32x32xf32>, vector<32x32xf32> -> vector<64x32xf32>
    %9 = arith.truncf %8 : vector<64x32xf32> to vector<64x32xbf16>
    %cst = arith.constant dense<0.000000e+00> : vector<24x64xf32>
    %10 = tpu.matmul %5, %9, %cst {dimension_numbers = #tpu.dot_dimension_numbers<[1], [1], [0], [0], [0, 0, 1, 0], [], []>} : vector<24x32xbf16>, vector<64x32xbf16>, vector<24x64xf32> -> vector<24x64xf32>
    %11 = vector.extract_strided_slice %10 {offsets = [0, 0], sizes = [8, 32], strides = [1, 1]} : vector<24x64xf32> to vector<8x32xf32>
    %c0_9 = arith.constant 0 : index
    %c0_10 = arith.constant 0 : index
    %12 = vector.load %arg4[%c0_9, %c0_10] : memref<1x32xf32, #tpu.memory_space<vmem>>, vector<1x32xf32>
    %13 = vector.broadcast %12 : vector<1x32xf32> to vector<8x32xf32>
    %14 = arith.addf %11, %13 : vector<8x32xf32>
    %cst_11 = arith.constant 0.176776692 : f32
    %15 = vector.broadcast %cst_11 : f32 to vector<8x32xf32>
    %16 = arith.mulf %14, %15 : vector<8x32xf32>
    %17 = vector.extract_strided_slice %10 {offsets = [8, 32], sizes = [16, 32], strides = [1, 1]} : vector<24x64xf32> to vector<16x32xf32>
    %c0_12 = arith.constant 0 : index
    %c0_13 = arith.constant 0 : index
    %18 = vector.load %arg6[%c0_12, %c0_13] : memref<1x32xf32, #tpu.memory_space<vmem>>, vector<1x32xf32>
    %19 = vector.broadcast %18 : vector<1x32xf32> to vector<16x32xf32>
    %20 = arith.addf %17, %19 : vector<16x32xf32>
    %21 = arith.truncf %16 : vector<8x32xf32> to vector<8x32xbf16>
    %22 = arith.truncf %20 : vector<16x32xf32> to vector<16x32xbf16>
    %cst_14 = arith.constant dense<0.000000e+00> : vector<8x16xf32>
    %23 = tpu.matmul %21, %22, %cst_14 {dimension_numbers = #tpu.dot_dimension_numbers<[1], [1], [0], [0], [0, 0, 1, 0], [], []>} : vector<8x32xbf16>, vector<16x32xbf16>, vector<8x16xf32> -> vector<8x16xf32>
    %cst_15 = arith.constant dense<0xFF800000> : vector<8xf32>
    %24 = vector.multi_reduction <maximumf>, %23, %cst_15 [1] : vector<8x16xf32> to vector<8xf32>
    %25 = vector.shape_cast %24 : vector<8xf32> to vector<8x1xf32>
    %26 = vector.broadcast %25 : vector<8x1xf32> to vector<8x16xf32>
    %27 = arith.subf %23, %26 : vector<8x16xf32>
    %28 = math.exp %27 : vector<8x16xf32>
    %cst_16 = arith.constant dense<0.000000e+00> : vector<8xf32>
    %29 = vector.multi_reduction <add>, %28, %cst_16 [1] : vector<8x16xf32> to vector<8xf32>
    %30 = vector.shape_cast %29 : vector<8xf32> to vector<8x1xf32>
    %31 = tpu.reciprocal %30 : vector<8x1xf32> -> vector<8x1xf32>
    %32 = vector.broadcast %31 : vector<8x1xf32> to vector<8x16xf32>
    %33 = arith.mulf %28, %32 : vector<8x16xf32>
    %c0_17 = arith.constant 0 : index
    %c0_18 = arith.constant 0 : index
    %c0_19 = arith.constant 0 : index
    %34 = vector.load %arg7[%c0_17, %c0_18, %c0_19] : memref<1x8x16xf32, #tpu.memory_space<vmem>>, vector<1x8x16xf32>
    %35 = vector.shape_cast %34 : vector<1x8x16xf32> to vector<8x16xf32>
    %36 = vector.shape_cast %33 : vector<8x16xf32> to vector<1x8x16xf32>
    tpu.vector_store %arg7[%c0_17, %c0_18, %c0_19], %36 {strides = array<i32>} : memref<1x8x16xf32, #tpu.memory_space<vmem>>, vector<1x8x16xf32>,
    return
  }
  func.func @transform_0(%arg0: i32) -> (i32, i32, i32) {
    %c0_i32 = arith.constant 0 : i32
    %c0_i32_0 = arith.constant 0 : i32
    %c0_i32_1 = arith.constant 0 : i32
    return %arg0, %c0_i32, %c0_i32_0 : i32, i32, i32
  }
  func.func @transform_1(%arg0: i32) -> (i32, i32, i32) {
    %c0_i32 = arith.constant 0 : i32
    %c0_i32_0 = arith.constant 0 : i32
    %c0_i32_1 = arith.constant 0 : i32
    return %arg0, %c0_i32, %c0_i32_0 : i32, i32, i32
  }
  func.func @transform_2(%arg0: i32) -> (i32, i32) {
    %c0_i32 = arith.constant 0 : i32
    %c0_i32_0 = arith.constant 0 : i32
    %c0_i32_1 = arith.constant 0 : i32
    return %c0_i32, %c0_i32_0 : i32, i32
  }
  func.func @transform_3(%arg0: i32) -> (i32, i32) {
    %c0_i32 = arith.constant 0 : i32
    %c0_i32_0 = arith.constant 0 : i32
    %c0_i32_1 = arith.constant 0 : i32
    return %c0_i32, %c0_i32_0 : i32, i32
  }
  func.func @transform_4(%arg0: i32) -> (i32, i32) {
    %c0_i32 = arith.constant 0 : i32
    %c0_i32_0 = arith.constant 0 : i32
    %c0_i32_1 = arith.constant 0 : i32
    return %c0_i32, %c0_i32_0 : i32, i32
  }
  func.func @transform_5(%arg0: i32) -> (i32, i32) {
    %c0_i32 = arith.constant 0 : i32
    %c0_i32_0 = arith.constant 0 : i32
    %c0_i32_1 = arith.constant 0 : i32
    return %c0_i32, %c0_i32_0 : i32, i32
  }
  func.func @transform_6(%arg0: i32) -> (i32, i32, i32) {
    %c0_i32 = arith.constant 0 : i32
    %c0_i32_0 = arith.constant 0 : i32
    %c0_i32_1 = arith.constant 0 : i32
    return %arg0, %c0_i32, %c0_i32_0 : i32, i32, i32
  }
}

</mosaic_0001>

<llo_original>
// kernel: tpu_custom_call.1
$region0: #{tpu_custom_call.1}
  #allocation0 [shape = 'u32[]', space=smem, size = 0x4, offset = 0x4, fixed_abs, tag = 'smem constant byte address 0x4 - core index']
  #allocation1 [shape = 'u32[144,128]{1,0:T(1,128)}', space=vmem, size = 0x12000, scoped, tag = 'internal scratch']
  %s0 = inlined_call_operand.hbm [shape: f32[1,8,32], index: 0, kind: input, shape index: {}]
  %s1 = inlined_call_operand.hbm [shape: f32[1,16,32], index: 1, kind: input, shape index: {}]
  %s2 = inlined_call_operand.hbm [shape: f32[32,32], index: 2, kind: input, shape index: {}]
  %s3 = inlined_call_operand.vmem [shape: f32[1,32], index: 3, kind: input, shape index: {}]
  %s4 = inlined_call_operand.hbm [shape: f32[32,32], index: 4, kind: input, shape index: {}]
  %s5 = inlined_call_operand.vmem [shape: f32[1,32], index: 5, kind: input, shape index: {}]
  %s6 = inlined_call_operand.hbm [shape: f32[1,8,16], index: 6, kind: output, shape index: {}]
  %s7 = sld [smem:[#allocation0]]
  $region50: #{tpu_custom_call.1} parent=0
    _
  %s9 = ssub.s32 1, %s7
  %s10 = scalar_select 0, %s9, %s7
  $region1: #{tpu_custom_call.1} parent=0
    #allocation2 [shape = 'u8[4096]{0}', space=vmem, size = 0x1000, scoped, tag = 'input window, operand 0, single buffered']
    #allocation3 [shape = 's32[1]{0}', space=sflag, size = 0x4, scoped, tag = 'scoped memory for tpu_custom_call.1']
    #allocation4 [shape = 's32[1]{0}', space=sflag, size = 0x4, scoped, tag = 'scoped memory for tpu_custom_call.1']
    #allocation5 [shape = 'u8[8192]{0}', space=vmem, size = 0x2000, scoped, tag = 'input window, operand 1, single buffered']
    #allocation6 [shape = 's32[1]{0}', space=sflag, size = 0x4, scoped, tag = 'scoped memory for tpu_custom_call.1']
    #allocation7 [shape = 'u8[16384]{0}', space=vmem, size = 0x4000, scoped, tag = 'input window, operand 2, single buffered']
    #allocation8 [shape = 'u8[16384]{0}', space=vmem, size = 0x4000, scoped, tag = 'input window, operand 4, single buffered']
    #allocation9 [shape = 's32[1]{0}', space=sflag, size = 0x4, scoped, tag = 'scoped memory for tpu_custom_call.1']
    #allocation10 [shape = 'u8[4096]{0}', space=vmem, size = 0x1000, scoped, tag = 'output window, operand 0, single buffered']
    %11 = vsyncpa [#allocation3], 0
    %12 = vsyncpa [#allocation6], 0
    %13 = vsyncpa [#allocation9], 0
    %14 = vsyncpa [#allocation4], 0
    // Predicated region
    $region2: #{tpu_custom_call.1} parent=1 // pred_check
      _
    $region3: #{tpu_custom_call.1} parent=1 // pred_check_branch
      %16 = sbr.rel (0) target = $region5
    $region4: #{tpu_custom_call.1} parent=1 // pred_region
      %s18 = ssub.s32 128, 128
      %19 = vsyncadd [#allocation3], %s18
      %s21 = sshll.u32 [#allocation2], 4
      %s22 = int_to_ptr.vmem [resolvable:$true] %s21
      %24 = dma.hbm_to_vmem [thread:$0]  %s0, 128, %s22, [#allocation3]
    $region5: #{tpu_custom_call.1} parent=1 // pred_fallthru
      _
    // Predicated region
    $region6: #{tpu_custom_call.1} parent=1 // pred_check
      _
    $region7: #{tpu_custom_call.1} parent=1 // pred_check_branch
      %26 = sbr.rel (0) target = $region9
    $region8: #{tpu_custom_call.1} parent=1 // pred_region
      %s28 = ssub.s32 256, 256
      %29 = vsyncadd [#allocation6], %s28
      %s30 = sshll.u32 [#allocation5], 4
      %s31 = int_to_ptr.vmem [resolvable:$true] %s30
      %36 = dma.hbm_to_vmem [thread:$0]  %s1, 256, %s31, [#allocation6], 128, 128, 8
    $region9: #{tpu_custom_call.1} parent=1 // pred_fallthru
      _
    // Predicated region
    $region10: #{tpu_custom_call.1} parent=1 // pred_check
      _
    $region11: #{tpu_custom_call.1} parent=1 // pred_check_branch
      %38 = sbr.rel (0) target = $region13
    $region12: #{tpu_custom_call.1} parent=1 // pred_region
      %s40 = ssub.s32 512, 512
      %41 = vsyncadd [#allocation6], %s40
      %s42 = sshll.u32 [#allocation7], 4
      %s43 = int_to_ptr.vmem [resolvable:$true] %s42
      %48 = dma.hbm_to_vmem [thread:$0]  %s2, 512, %s43, [#allocation6], 128, 128, 8
    $region13: #{tpu_custom_call.1} parent=1 // pred_fallthru
      _
    // Predicated region
    $region14: #{tpu_custom_call.1} parent=1 // pred_check
      _
    $region15: #{tpu_custom_call.1} parent=1 // pred_check_branch
      %50 = sbr.rel (0) target = $region17
    $region16: #{tpu_custom_call.1} parent=1 // pred_region
      _
    $region17: #{tpu_custom_call.1} parent=1 // pred_fallthru
      _
    // Predicated region
    $region18: #{tpu_custom_call.1} parent=1 // pred_check
      _
    $region19: #{tpu_custom_call.1} parent=1 // pred_check_branch
      %52 = sbr.rel (0) target = $region21
    $region20: #{tpu_custom_call.1} parent=1 // pred_region
      %s54 = ssub.s32 512, 512
      %55 = vsyncadd [#allocation9], %s54
      %s56 = sshll.u32 [#allocation8], 4
      %s57 = int_to_ptr.vmem [resolvable:$true] %s56
      %62 = dma.hbm_to_vmem [thread:$0]  %s4, 512, %s57, [#allocation9], 128, 128, 8
    $region21: #{tpu_custom_call.1} parent=1 // pred_fallthru
      _
    // Predicated region
    $region22: #{tpu_custom_call.1} parent=1 // pred_check
      _
    $region23: #{tpu_custom_call.1} parent=1 // pred_check_branch
      %64 = sbr.rel (0) target = $region25
    $region24: #{tpu_custom_call.1} parent=1 // pred_region
      _
    $region25: #{tpu_custom_call.1} parent=1 // pred_fallthru
      _
    // Predicated region
    $region26: #{tpu_custom_call.1} parent=1 // pred_check
      _
    $region27: #{tpu_custom_call.1} parent=1 // pred_check_branch
      %66 = sbr.rel (0) target = $region29
    $region28: #{tpu_custom_call.1} parent=1 // pred_region
      %67 = dma.done [#allocation3], 128
    $region29: #{tpu_custom_call.1} parent=1 // pred_fallthru
      _
    // Predicated region
    $region30: #{tpu_custom_call.1} parent=1 // pred_check
      _
    $region31: #{tpu_custom_call.1} parent=1 // pred_check_branch
      %69 = sbr.rel (0) target = $region33
    $region32: #{tpu_custom_call.1} parent=1 // pred_region
      %70 = dma.done [#allocation6], 256
    $region33: #{tpu_custom_call.1} parent=1 // pred_fallthru
      _
    // Predicated region
    $region34: #{tpu_custom_call.1} parent=1 // pred_check
      _
    $region35: #{tpu_custom_call.1} parent=1 // pred_check_branch
      %72 = sbr.rel (0) target = $region37
    $region36: #{tpu_custom_call.1} parent=1 // pred_region
      %73 = dma.done [#allocation6], 512
    $region37: #{tpu_custom_call.1} parent=1 // pred_fallthru
      _
    // Predicated region
    $region38: #{tpu_custom_call.1} parent=1 // pred_check
      _
    $region39: #{tpu_custom_call.1} parent=1 // pred_check_branch
      %75 = sbr.rel (0) target = $region41
    $region40: #{tpu_custom_call.1} parent=1 // pred_region
      %76 = dma.done [#allocation9], 512
    $region41: #{tpu_custom_call.1} parent=1 // pred_fallthru
      _
    %v78 = vld [vmem:[#allocation2] sm:$0xff]
    %v79 = vld [vmem:[#allocation5] sm:$0xff]
    %v80 = vld [vmem:[#allocation5 + $0x8] sm:$0xff]
    %v81 = vpack.c.bf16 %v79, %v78
    %v82 = vpack.c.bf16 %v80, %v80
    %v83 = vld [vmem:[#allocation7] sm:$0xff]
    %v84 = vld [vmem:[#allocation7 + $0x8] sm:$0xff]
    %v85 = vld [vmem:[#allocation7 + $0x10] sm:$0xff]
    %v86 = vld [vmem:[#allocation7 + $0x18] sm:$0xff]
    %v87 = vld [vmem:[#allocation8] sm:$0xff]
    %v88 = vld [vmem:[#allocation8 + $0x8] sm:$0xff]
    %v89 = vld [vmem:[#allocation8 + $0x10] sm:$0xff]
    %v90 = vld [vmem:[#allocation8 + $0x18] sm:$0xff]
    %v91 = vpack.c.bf16 %v84, %v83
    %v92 = vpack.c.bf16 %v86, %v85
    %v93 = vpack.c.bf16 %v88, %v87
    %v94 = vpack.c.bf16 %v90, %v89
    %vm95 = vcmask 261120
    %v97 = vsel %vm95, %v81, 0
    %v100 = vsel %vm95, %v82, 0
    %v103 = vsel %vm95, %v91, 0
    %v106 = vsel %vm95, %v92, 0
    %v109 = vsel %vm95, %v93, 0
    %v112 = vsel %vm95, %v94, 0
    %114 = vmatprep.subr.bf16.mxu0 0
    %115 = vmatpush1.bf16.xpose.msra.mxu0 0
    %116 = vmatprep.subr.bf16.mxu0 0
    %117 = vmatpush1.bf16.xpose.msra.mxu0 0
    %118 = vmatprep.subr.bf16.mxu0 0
    %119 = vmatpush1.bf16.xpose.msra.mxu0 0
    %120 = vmatprep.subr.bf16.mxu0 0
    %121 = vmatpush1.bf16.xpose.msra.mxu0 0
    %122 = vmatprep.subr.bf16.mxu0 0
    %123 = vmatpush1.bf16.xpose.msra.mxu0 %v112
    %124 = vmatprep.subr.bf16.mxu0 0
    %125 = vmatpush1.bf16.xpose.msra.mxu0 %v109
    %126 = vmatprep.subr.bf16.mxu0 0
    %127 = vmatpush1.bf16.xpose.msra.mxu0 %v106
    %128 = vmatprep.subr.bf16.mxu0 0
    %129 = vmatpush1.bf16.xpose.msra.mxu0 %v103
    %130 = vmatprep.subr.bf16.mxu0 0
    %131 = vmatpush2.bf16.xpose.msra.mxu0 0
    %132 = vmatprep.subr.bf16.mxu0 0
    %133 = vmatpush2.bf16.xpose.msra.mxu0 0
    %134 = vmatprep.subr.bf16.mxu0 0
    %135 = vmatpush2.bf16.xpose.msra.mxu0 0
    %136 = vmatprep.subr.bf16.mxu0 0
    %137 = vmatpush2.bf16.xpose.msra.mxu0 0
    %138 = vmatprep.subr.bf16.mxu0 0
    %139 = vmatpush2.bf16.xpose.msra.mxu0 0
    %140 = vmatprep.subr.bf16.mxu0 0
    %141 = vmatpush2.bf16.xpose.msra.mxu0 0
    %142 = vmatprep.subr.bf16.mxu0 0
    %143 = vmatpush2.bf16.xpose.msra.mxu0 0
    %144 = vmatprep.subr.bf16.mxu0 0
    %145 = vmatpush2.bf16.xpose.msra.mxu0 0
    %146 = vmatprep.mubr.bf16.mxu0 0
    %147 = vmatmul.mubr.bf16.gmra.mxu0 %v97
    %v148 = vpop.f32.mrf.mxu0
    %v149 = vadd.f32 0.0, %v148
    %v150 = vpop.f32.mrf.mxu0
    %v151 = vpop.f32.mrf.mxu0
    %v152 = vadd.f32 0.0, %v151
    %v153 = vpop.f32.mrf.mxu0
    %154 = vmatprep.mubr.bf16.mxu0 0
    %155 = vmatmul.mubr.bf16.gmra.mxu0 %v100
    %v156 = vpop.f32.mrf.mxu0
    %v157 = vadd.f32 0.0, %v156
    %v158 = vpop.f32.mrf.mxu0
    %v159 = vpop.f32.mrf.mxu0
    %v160 = vpop.f32.mrf.mxu0
    %161 = vdwg.mxu0
    %v162 = vld [vmem:[%s3] sm:$0x1]
    %v164 = vlaneseq
    %v165 = vshrl.u32 %v164, 7
    %v166 = vsub.s32 0, %v165
    %v167 = vrot.slane %v162, %v166
    %v169 = vadd.f32 %v149, %v167
    %v170 = vmul.f32 %v169, 0.17677669
    %v171 = vld [vmem:[%s5] sm:$0x1]
    %v173 = vlaneseq
    %v174 = vshrl.u32 %v173, 7
    %v175 = vsub.s32 0, %v174
    %v176 = vrot.slane %v171, %v175
    %177 = vrot.lane.b32.xlu0 %v176, 32
    %v178 = vpop.permute.xlu0 %177
    %v180 = vadd.f32 %v152, %v178
    %v181 = vadd.f32 %v157, %v178
    %v182 = vpack.c.bf16 %v170, %v170
    %v183 = vpack.c.bf16 %v181, %v180
    %185 = vrot.lane.b32.xlu0 %v183, 96
    %v186 = vpop.permute.xlu0 %185
    %v188 = vsel %vm95, %v182, 0
    %v191 = vsel %vm95, %v186, 0
    %193 = vmatprep.subr.bf16.mxu0 0
    %194 = vmatpush1.bf16.xpose.msra.mxu0 0
    %195 = vmatprep.subr.bf16.mxu0 0
    %196 = vmatpush1.bf16.xpose.msra.mxu0 0
    %197 = vmatprep.subr.bf16.mxu0 0
    %198 = vmatpush1.bf16.xpose.msra.mxu0 0
    %199 = vmatprep.subr.bf16.mxu0 0
    %200 = vmatpush1.bf16.xpose.msra.mxu0 0
    %201 = vmatprep.subr.bf16.mxu0 0
    %202 = vmatpush1.bf16.xpose.msra.mxu0 0
    %203 = vmatprep.subr.bf16.mxu0 0
    %204 = vmatpush1.bf16.xpose.msra.mxu0 0
    %205 = vmatprep.subr.bf16.mxu0 0
    %206 = vmatpush1.bf16.xpose.msra.mxu0 0
    %207 = vmatprep.subr.bf16.mxu0 0
    %208 = vmatpush1.bf16.xpose.msra.mxu0 %v191
    %209 = vmatprep.subr.bf16.mxu0 0
    %210 = vmatpush2.bf16.xpose.msra.mxu0 0
    %211 = vmatprep.subr.bf16.mxu0 0
    %212 = vmatpush2.bf16.xpose.msra.mxu0 0
    %213 = vmatprep.subr.bf16.mxu0 0
    %214 = vmatpush2.bf16.xpose.msra.mxu0 0
    %215 = vmatprep.subr.bf16.mxu0 0
    %216 = vmatpush2.bf16.xpose.msra.mxu0 0
    %217 = vmatprep.subr.bf16.mxu0 0
    %218 = vmatpush2.bf16.xpose.msra.mxu0 0
    %219 = vmatprep.subr.bf16.mxu0 0
    %220 = vmatpush2.bf16.xpose.msra.mxu0 0
    %221 = vmatprep.subr.bf16.mxu0 0
    %222 = vmatpush2.bf16.xpose.msra.mxu0 0
    %223 = vmatprep.subr.bf16.mxu0 0
    %224 = vmatpush2.bf16.xpose.msra.mxu0 0
    %225 = vmatprep.mubr.bf16.mxu0 0
    %226 = vmatmul.mubr.bf16.gmra.mxu0 %v188
    %v227 = vpop.f32.mrf.mxu0
    %v228 = vadd.f32 0.0, %v227
    %v229 = vpop.f32.mrf.mxu0
    %v230 = vpop.f32.mrf.mxu0
    %v231 = vpop.f32.mrf.mxu0
    %232 = vdwg.mxu0
    %vm233 = vcmask 130048
    %v234 = vsel %vm233, %v228, -inf
    %235 = vmax.xlane.f32.xlu0 %v234
    %v236 = vpop.xlane.xlu0 %235
    %v237 = vsub.f32 %v228, %v236
    %v238 = vmul.f32 %v237, 1.442695
    %v239 = vpow.pop %v238
    %v240 = vsel %vm233, %v239, 0.0
    %241 = vadd.xlane.f32.xlu0 %v240
    %v242 = vpop.xlane.xlu0 %241
    %v243 = vrcp.pop %v242
    %v244 = vmul.f32 %v239, %v243
    %245 = vst.msk [vmem:[#allocation10] sm:$0xff] %vm233, %v244
    // Predicated region
    $region42: #{tpu_custom_call.1} parent=1 // pred_check
      _
    $region43: #{tpu_custom_call.1} parent=1 // pred_check_branch
      %247 = sbr.rel (0) target = $region45
    $region44: #{tpu_custom_call.1} parent=1 // pred_region
      %s249 = ssub.s32 128, 128
      %250 = vsyncadd [#allocation4], %s249
      %s252 = sshll.u32 [#allocation10], 4
      %s253 = int_to_ptr.vmem [resolvable:$true] %s252
      %255 = dma.vmem_to_hbm [thread:$0]  %s253, 128, %s6, [#allocation4]
    $region45: #{tpu_custom_call.1} parent=1 // pred_fallthru
      _
    // Predicated region
    $region46: #{tpu_custom_call.1} parent=1 // pred_check
      _
    $region47: #{tpu_custom_call.1} parent=1 // pred_check_branch
      %257 = sbr.rel (0) target = $region49
    $region48: #{tpu_custom_call.1} parent=1 // pred_region
      %258 = dma.done [#allocation4], 128
    $region49: #{tpu_custom_call.1} parent=1 // pred_fallthru
      _
    %259 = vsyncpa [#allocation3], 1
    %260 = vsyncpa [#allocation6], 1
    %261 = vsyncpa [#allocation9], 1
    %262 = vsyncpa [#allocation4], 1

</llo_original>
